<compile_context>
chip_gen: v7x
topology: tpu7x:2x2x1
jax: 0.10.0
libtpu: 0.0.40
codegen_flags: <defaults>
</compile_context>

<pallas_src>
import jax
import jax.numpy as jnp
from jax.experimental import pallas as pl
from jax.experimental.pallas import tpu as pltpu


def _pick_batch_tile(nc, h, w, itemsize, budget_bytes=8 << 20):
    """Pick the block size B along the fused (N*C) axis.

    Whole axis if it fits the per-block budget; otherwise the largest
    divisor of nc that is a multiple of 8 (keeps the (B, W) output block
    (8,128)-tiling friendly) and fits the budget.  Falls back to the full
    axis only if no such divisor exists (rare, odd shapes).
    """
    per_row = h * w * itemsize
    if nc * per_row <= budget_bytes:
        return nc
    best = None
    b = 8
    while b <= nc:
        if nc % b == 0 and b * per_row <= budget_bytes:
            best = b
        b += 8
    return best if best is not None else nc


def fgs1_forward(x):
    """Pallas implementation of FGS1_Model.forward: mean over axis 2.

    x: (N, C, H, W) -> (N, C, W)   (any rank >= 3 is supported; axis 2 is
    reduced, leading/trailing dims are collapsed with free reshapes).
    """
    shape = x.shape
    assert len(shape) >= 3, "mean(axis=2) needs rank >= 3"
    lead = shape[:2]
    H = shape[2]
    trail = shape[3:]

    NC = 1
    for d in lead:
        NC *= d
    W = 1
    for d in trail:
        W *= d

    # Free, row-major collapse — no data movement, no extra kernel.
    x3 = x.reshape(NC, H, W)

    itemsize = jnp.dtype(x.dtype).itemsize
    B = _pick_batch_tile(NC, H, W, itemsize)
    grid = (NC // B,)

    # Explicit scoped-VMEM limit sized from the actual blocks (input + output,
    # double buffered, plus slack); capped safely below v7x's 64 MiB physical.
    in_block_bytes = B * H * W * itemsize
    out_block_bytes = B * W * itemsize
    vmem_limit = int(2.5 * (in_block_bytes + out_block_bytes)) + (2 << 20)
    vmem_limit = max(16 << 20, min(vmem_limit, 48 << 20))

    inv_h = 1.0 / H  # baked at trace time; one VPU multiply per vreg

    # Accumulate in f32 for sub-32-bit inputs (bf16/fp8); f32 stays f32.
    acc_dtype = jnp.float32 if itemsize < 4 else x.dtype

    def _mean_kernel(x_ref, o_ref):
        # x_ref: (B, H, W) tile; sublane-reduce over H -> lane-dense (B, W).
        s = jnp.sum(x_ref[...], axis=1, dtype=acc_dtype)
        o_ref[...] = (s * inv_h).astype(o_ref.dtype)

    out2 = pl.pallas_call(
        _mean_kernel,
        out_shape=jax.ShapeDtypeStruct((NC, W), x.dtype),
        grid=grid,
        in_specs=[pl.BlockSpec((B, H, W), lambda i: (i, 0, 0))],
        out_specs=pl.BlockSpec((B, W), lambda i: (i, 0)),
        compiler_params=pltpu.CompilerParams(
            dimension_semantics=("parallel",),
            vmem_limit_bytes=vmem_limit,
        ),
    )(x3)

    return out2.reshape(*lead, *trail)


if __name__ == "__main__":
    key = jax.random.PRNGKey(0)
    # Small NCHW conv-style input consistent with the module.
    x = jax.random.normal(key, (2, 4, 16, 16), dtype=jnp.float32)

    out = fgs1_forward(x)
    out = jax.block_until_ready(out)

    # Reference: same semantics as torch's x.mean(axis=2).
    ref = jnp.mean(x, axis=2)
    assert out.shape == (2, 4, 16), out.shape
    assert jnp.allclose(out, ref, atol=1e-6, rtol=1e-6), "mismatch vs reference"

    print("KERNEL_OK")
</pallas_src>

<mosaic_0001>
module attributes {stable_mosaic.version = 11 : i64} {
  func.func @_mean_kernel(%arg0: i32, %arg1: memref<8x16x16xf32, #tpu.memory_space<vmem>>, %arg2: memref<8x16xf32, #tpu.memory_space<vmem>>) attributes {dimension_semantics = [#tpu.dimension_semantics<parallel>], iteration_bounds = array<i64: 1>, scalar_prefetch = 0 : i64, scratch_operands = 0 : i64, tpu.core_type = #tpu.core_type<tc>, window_params = [{transform_indices = @transform_0, window_bounds = array<i64: 8, 16, 16>}, {transform_indices = @transform_1, window_bounds = array<i64: 8, 16>}]} {
    %c0 = arith.constant 0 : index
    %c0_0 = arith.constant 0 : index
    %c0_1 = arith.constant 0 : index
    %0 = vector.load %arg1[%c0, %c0_0, %c0_1] : memref<8x16x16xf32, #tpu.memory_space<vmem>>, vector<8x16x16xf32>
    %cst = arith.constant dense<0.000000e+00> : vector<8x16xf32>
    %1 = vector.multi_reduction <add>, %0, %cst [1] : vector<8x16x16xf32> to vector<8x16xf32>
    %cst_2 = arith.constant 6.250000e-02 : f32
    %2 = vector.broadcast %cst_2 : f32 to vector<8x16xf32>
    %3 = arith.mulf %1, %2 : vector<8x16xf32>
    %c0_3 = arith.constant 0 : index
    %c0_4 = arith.constant 0 : index
    %4 = vector.load %arg2[%c0_3, %c0_4] : memref<8x16xf32, #tpu.memory_space<vmem>>, vector<8x16xf32>
    tpu.vector_store %arg2[%c0_3, %c0_4], %3 {strides = array<i32>} : memref<8x16xf32, #tpu.memory_space<vmem>>, vector<8x16xf32>,
    return
  }
  func.func @transform_0(%arg0: i32) -> (i32, i32, i32) {
    %c0_i32 = arith.constant 0 : i32
    %c0_i32_0 = arith.constant 0 : i32
    %c0_i32_1 = arith.constant 0 : i32
    return %arg0, %c0_i32, %c0_i32_0 : i32, i32, i32
  }
  func.func @transform_1(%arg0: i32) -> (i32, i32) {
    %c0_i32 = arith.constant 0 : i32
    %c0_i32_0 = arith.constant 0 : i32
    return %arg0, %c0_i32 : i32, i32
  }
}

</mosaic_0001>

<llo_original>
// kernel: tpu_custom_call.1
$region0: #{tpu_custom_call.1}
  #allocation0 [shape = 'u32[]', space=smem, size = 0x4, offset = 0x4, fixed_abs, tag = 'smem constant byte address 0x4 - core index']
  #allocation1 [shape = 'u32[144,128]{1,0:T(1,128)}', space=vmem, size = 0x12000, scoped, tag = 'internal scratch']
  %s0 = inlined_call_operand.hbm [shape: f32[8,16,16], index: 0, kind: input, shape index: {}]
  %s1 = inlined_call_operand.hbm [shape: f32[8,16], index: 1, kind: output, shape index: {}]
  %s2 = sld [smem:[#allocation0]]
  $region18: #{tpu_custom_call.1} parent=0
    _
  %s4 = ssub.s32 1, %s2
  %s5 = scalar_select 0, %s4, %s2
  $region1: #{tpu_custom_call.1} parent=0
    #allocation2 [shape = 'u8[65536]{0}', space=vmem, size = 0x10000, scoped, tag = 'input window, operand 0, single buffered']
    #allocation3 [shape = 's32[1]{0}', space=sflag, size = 0x4, scoped, tag = 'scoped memory for tpu_custom_call.1']
    #allocation4 [shape = 's32[1]{0}', space=sflag, size = 0x4, scoped, tag = 'scoped memory for tpu_custom_call.1']
    #allocation5 [shape = 'u8[4096]{0}', space=vmem, size = 0x1000, scoped, tag = 'output window, operand 0, single buffered']
    %6 = vsyncpa [#allocation3], 0
    %7 = vsyncpa [#allocation4], 0
    // Predicated region
    $region2: #{tpu_custom_call.1} parent=1 // pred_check
      _
    $region3: #{tpu_custom_call.1} parent=1 // pred_check_branch
      %9 = sbr.rel (0) target = $region5
    $region4: #{tpu_custom_call.1} parent=1 // pred_region
      %s11 = ssub.s32 2048, 2048
      %12 = vsyncadd [#allocation3], %s11
      %s13 = sshll.u32 [#allocation2], 4
      %s14 = int_to_ptr.vmem [resolvable:$true] %s13
      %19 = dma.hbm_to_vmem [thread:$0]  %s0, 2048, %s14, [#allocation3], 128, 128, 8
    $region5: #{tpu_custom_call.1} parent=1 // pred_fallthru
      _
    // Predicated region
    $region6: #{tpu_custom_call.1} parent=1 // pred_check
      _
    $region7: #{tpu_custom_call.1} parent=1 // pred_check_branch
      %21 = sbr.rel (0) target = $region9
    $region8: #{tpu_custom_call.1} parent=1 // pred_region
      %22 = dma.done [#allocation3], 2048
    $region9: #{tpu_custom_call.1} parent=1 // pred_fallthru
      _
    %v23 = vld [vmem:[#allocation2] sm:$0xff]
    %v24 = vld [vmem:[#allocation2 + $0x8] sm:$0xff]
    %v25 = vld [vmem:[#allocation2 + $0x10] sm:$0xff]
    %v26 = vld [vmem:[#allocation2 + $0x18] sm:$0xff]
    %v27 = vld [vmem:[#allocation2 + $0x20] sm:$0xff]
    %v28 = vld [vmem:[#allocation2 + $0x28] sm:$0xff]
    %v29 = vld [vmem:[#allocation2 + $0x30] sm:$0xff]
    %v30 = vld [vmem:[#allocation2 + $0x38] sm:$0xff]
    %v31 = vld [vmem:[#allocation2 + $0x40] sm:$0xff]
    %v32 = vld [vmem:[#allocation2 + $0x48] sm:$0xff]
    %v33 = vld [vmem:[#allocation2 + $0x50] sm:$0xff]
    %v34 = vld [vmem:[#allocation2 + $0x58] sm:$0xff]
    %v35 = vld [vmem:[#allocation2 + $0x60] sm:$0xff]
    %v36 = vld [vmem:[#allocation2 + $0x68] sm:$0xff]
    %v37 = vld [vmem:[#allocation2 + $0x70] sm:$0xff]
    %v38 = vld [vmem:[#allocation2 + $0x78] sm:$0xff]
    %vm39 = vcmask 130048
    %v40 = vsel %vm39, %v23, 0.0
    %v41 = vsel %vm39, %v24, 0.0
    %v42 = vadd.f32 %v40, %v41
    %v43 = vrot.slane %v42, 4
    %v44 = vadd.f32 %v42, %v43
    %v45 = vrot.slane %v44, 2
    %v46 = vadd.f32 %v44, %v45
    %v47 = vrot.slane %v46, 1
    %v48 = vadd.f32 %v46, %v47
    %v49 = vsel %vm39, %v25, 0.0
    %v50 = vsel %vm39, %v26, 0.0
    %v51 = vadd.f32 %v49, %v50
    %v52 = vrot.slane %v51, 4
    %v53 = vadd.f32 %v51, %v52
    %v54 = vrot.slane %v53, 2
    %v55 = vadd.f32 %v53, %v54
    %v56 = vrot.slane %v55, 1
    %v57 = vadd.f32 %v55, %v56
    %v58 = vsel %vm39, %v27, 0.0
    %v59 = vsel %vm39, %v28, 0.0
    %v60 = vadd.f32 %v58, %v59
    %v61 = vrot.slane %v60, 4
    %v62 = vadd.f32 %v60, %v61
    %v63 = vrot.slane %v62, 2
    %v64 = vadd.f32 %v62, %v63
    %v65 = vrot.slane %v64, 1
    %v66 = vadd.f32 %v64, %v65
    %v67 = vsel %vm39, %v29, 0.0
    %v68 = vsel %vm39, %v30, 0.0
    %v69 = vadd.f32 %v67, %v68
    %v70 = vrot.slane %v69, 4
    %v71 = vadd.f32 %v69, %v70
    %v72 = vrot.slane %v71, 2
    %v73 = vadd.f32 %v71, %v72
    %v74 = vrot.slane %v73, 1
    %v75 = vadd.f32 %v73, %v74
    %v76 = vsel %vm39, %v31, 0.0
    %v77 = vsel %vm39, %v32, 0.0
    %v78 = vadd.f32 %v76, %v77
    %v79 = vrot.slane %v78, 4
    %v80 = vadd.f32 %v78, %v79
    %v81 = vrot.slane %v80, 2
    %v82 = vadd.f32 %v80, %v81
    %v83 = vrot.slane %v82, 1
    %v84 = vadd.f32 %v82, %v83
    %v85 = vsel %vm39, %v33, 0.0
    %v86 = vsel %vm39, %v34, 0.0
    %v87 = vadd.f32 %v85, %v86
    %v88 = vrot.slane %v87, 4
    %v89 = vadd.f32 %v87, %v88
    %v90 = vrot.slane %v89, 2
    %v91 = vadd.f32 %v89, %v90
    %v92 = vrot.slane %v91, 1
    %v93 = vadd.f32 %v91, %v92
    %v94 = vsel %vm39, %v35, 0.0
    %v95 = vsel %vm39, %v36, 0.0
    %v96 = vadd.f32 %v94, %v95
    %v97 = vrot.slane %v96, 4
    %v98 = vadd.f32 %v96, %v97
    %v99 = vrot.slane %v98, 2
    %v100 = vadd.f32 %v98, %v99
    %v101 = vrot.slane %v100, 1
    %v102 = vadd.f32 %v100, %v101
    %v103 = vsel %vm39, %v37, 0.0
    %v104 = vsel %vm39, %v38, 0.0
    %v105 = vadd.f32 %v103, %v104
    %v106 = vrot.slane %v105, 4
    %v107 = vadd.f32 %v105, %v106
    %v108 = vrot.slane %v107, 2
    %v109 = vadd.f32 %v107, %v108
    %v110 = vrot.slane %v109, 1
    %v111 = vadd.f32 %v109, %v110
    %v112 = vmul.f32 %v48, 0.0625
    %v113 = vmul.f32 %v57, 0.0625
    %v114 = vmul.f32 %v66, 0.0625
    %v115 = vmul.f32 %v75, 0.0625
    %v116 = vmul.f32 %v84, 0.0625
    %v117 = vmul.f32 %v93, 0.0625
    %v118 = vmul.f32 %v102, 0.0625
    %v119 = vmul.f32 %v111, 0.0625
    %vm128 = vcmask 1041409
    %v129 = vsel %vm128, %v113, %v112
    %vm130 = vcmask 1042434
    %v131 = vsel %vm130, %v114, %v129
    %vm132 = vcmask 1043459
    %v133 = vsel %vm132, %v115, %v131
    %vm134 = vcmask 1044484
    %v135 = vsel %vm134, %v116, %v133
    %vm136 = vcmask 1045509
    %v137 = vsel %vm136, %v117, %v135
    %vm138 = vcmask 1046534
    %v139 = vsel %vm138, %v118, %v137
    %vm140 = vcmask 1047559
    %v141 = vsel %vm140, %v119, %v139
    %143 = vst.msk [vmem:[#allocation5] sm:$0xff] %vm39, %v141
    // Predicated region
    $region10: #{tpu_custom_call.1} parent=1 // pred_check
      _
    $region11: #{tpu_custom_call.1} parent=1 // pred_check_branch
      %145 = sbr.rel (0) target = $region13
    $region12: #{tpu_custom_call.1} parent=1 // pred_region
      %s147 = ssub.s32 128, 128
      %148 = vsyncadd [#allocation4], %s147
      %s150 = sshll.u32 [#allocation5], 4
      %s151 = int_to_ptr.vmem [resolvable:$true] %s150
      %153 = dma.vmem_to_hbm [thread:$0]  %s151, 128, %s1, [#allocation4]
    $region13: #{tpu_custom_call.1} parent=1 // pred_fallthru
      _
    // Predicated region
    $region14: #{tpu_custom_call.1} parent=1 // pred_check
      _
    $region15: #{tpu_custom_call.1} parent=1 // pred_check_branch
      %155 = sbr.rel (0) target = $region17
    $region16: #{tpu_custom_call.1} parent=1 // pred_region
      %156 = dma.done [#allocation4], 128
    $region17: #{tpu_custom_call.1} parent=1 // pred_fallthru
      _
    %157 = vsyncpa [#allocation3], 1
    %158 = vsyncpa [#allocation4], 1

</llo_original>
